<compile_context>
chip_gen: v7x
topology: tpu7x:2x2x1
jax: 0.10.0
libtpu: 0.0.40
codegen_flags: <defaults>
</compile_context>

<pallas_src>
import math

import jax
import jax.numpy as jnp
from jax.experimental import pallas as pl
from jax.experimental.pallas import tpu as pltpu


def _platt_diag_kernel(x_ref, w_ref, b_ref, o_ref):
    # x_ref / o_ref: (TG, 8, L) lane-dense tile.
    # w_ref / b_ref: (8, L) sublane-replicated parameter slabs (whole-array
    # VMEM residents) -> full-vreg VPU operands, no in-loop sublane broadcast.
    o_ref[...] = x_ref[...] * w_ref[...] + b_ref[...]


def _vmem_budget():
    """(per-block byte budget, scoped-VMEM limit) per TPU generation."""
    try:
        kind = jax.devices()[0].device_kind.lower()
    except Exception:  # pragma: no cover - defensive; fall back to safe values
        kind = ""
    if ("v5" in kind) or ("v6" in kind):
        # 128 MiB physical VMEM: larger blocks + raised scoped limit.
        return 6 * 1024 * 1024, 64 * 1024 * 1024
    # v7x (64 MiB physical / 32 MiB scoped) and unknown chips: stay safe.
    # 2 in-bufs + 2 out-bufs at 4 MiB each + ~40 KiB params << 32 MiB.
    return 4 * 1024 * 1024, 32 * 1024 * 1024


def platt_diag_forward(logits, W, b, *, min_pallas_elements=1 << 20,
                       force_pallas=False):
    """logits: (N, C), W: (C,), b: (C,) -> (N, C).  out = logits * W + b."""
    N, C = logits.shape
    dtype = logits.dtype
    itemsize = jnp.dtype(dtype).itemsize
    Wd = W.astype(dtype)
    bd = b.astype(dtype)

    # Small-batch fast path: plain XLA fusion beats kernel dispatch + plumbing.
    if (not force_pallas) and (N * C < min_pallas_elements):
        return logits * Wd + bd

    # Lane-dense packing: L = lcm(C, 128) lanes x 8 sublanes per slab.
    L = math.lcm(C, 128)
    rows_per_group = L // C            # input rows packed into one lane-dense row
    group_rows = 8 * rows_per_group    # input rows per (8, L) slab
    N_bulk = (N // group_rows) * group_rows
    if N_bulk == 0:
        return logits * Wd + bd

    G = N_bulk // group_rows

    # Bulk prefix only (free reshape; no pad, no post-slice).
    x_bulk = logits if N_bulk == N else logits[:N_bulk]
    x_bulk = x_bulk.reshape(G, 8, L)

    # Parameter slabs tiled/broadcast once here (outside the grid loop).
    w_slab = jnp.broadcast_to(jnp.tile(Wd, rows_per_group).reshape(1, L), (8, L))
    b_slab = jnp.broadcast_to(jnp.tile(bd, rows_per_group).reshape(1, L), (8, L))

    target_block_bytes, vmem_limit = _vmem_budget()
    slab_bytes = 8 * L * itemsize
    TG = max(1, target_block_bytes // slab_bytes)
    # Never collapse to a 1-step grid: keep >= 2 row tiles so the "parallel"
    # axis can shard across both TensorCores on v7x (harmless on v5e/v6e).
    if G >= 2:
        TG = min(TG, pl.cdiv(G, 2))
    else:
        TG = 1
    grid = (pl.cdiv(G, TG),)

    out_bulk = pl.pallas_call(
        _platt_diag_kernel,
        out_shape=jax.ShapeDtypeStruct((G, 8, L), dtype),
        grid=grid,
        in_specs=[
            pl.BlockSpec((TG, 8, L), lambda i: (i, 0, 0)),
            # Parameters: whole-array VMEM residents (loaded once, not per step).
            pl.BlockSpec(memory_space=pltpu.MemorySpace.VMEM),
            pl.BlockSpec(memory_space=pltpu.MemorySpace.VMEM),
        ],
        out_specs=pl.BlockSpec((TG, 8, L), lambda i: (i, 0, 0)),
        compiler_params=pltpu.CompilerParams(
            dimension_semantics=("parallel",),  # shard row tiles across TCs (v7x)
            vmem_limit_bytes=vmem_limit,
        ),
    )(x_bulk, w_slab, b_slab)

    out_bulk = out_bulk.reshape(N_bulk, C)
    if N_bulk == N:
        return out_bulk
    # Tiny ragged tail (< group_rows rows) handled by XLA, then concatenated.
    out_rem = logits[N_bulk:] * Wd + bd
    return jnp.concatenate([out_bulk, out_rem], axis=0)


def init_platt_diag_params(key, out_size=10):
    """Deterministic synthetic init mirroring the PyTorch module:
    W = xavier_uniform_(diag_embed(ones(out_size))).diag(), b = ones(out_size)."""
    # xavier_uniform on an (out_size, out_size) matrix: U(-a, a),
    # a = sqrt(6 / (fan_in + fan_out)) = sqrt(6 / (2 * out_size))
    bound = math.sqrt(6.0 / (2.0 * out_size))
    full = jax.random.uniform(
        key, (out_size, out_size), minval=-bound, maxval=bound, dtype=jnp.float32
    )
    W = jnp.diag(full)
    b = jnp.ones((out_size,), dtype=jnp.float32)
    return W, b


if __name__ == "__main__":
    key = jax.random.PRNGKey(0)
    k_param, k1, k2, k3 = jax.random.split(key, 4)

    out_size = 10
    W, b = init_platt_diag_params(k_param, out_size=out_size)
    ref_fn = lambda x: x @ jnp.diag(W) + b  # the module's forward, verbatim

    # 1) Module-sized batch (8 x 10) -> small-N XLA fast path.
    x1 = jax.random.normal(k1, (8, out_size), dtype=jnp.float32)
    o1 = jax.block_until_ready(platt_diag_forward(x1, W, b))
    assert o1.shape == (8, out_size)
    assert jnp.allclose(o1, ref_fn(x1), atol=1e-6, rtol=1e-6)

    # 2) Aligned batch, Pallas path forced (N % (8*lcm(C,128)//C = 512) == 0):
    #    zero extra HBM passes, 2-step parallel grid, no remainder epilogue.
    x2 = jax.random.normal(k2, (1024, out_size), dtype=jnp.float32)
    o2 = jax.block_until_ready(platt_diag_forward(x2, W, b, force_pallas=True))
    assert o2.shape == (1024, out_size)
    assert jnp.allclose(o2, ref_fn(x2), atol=1e-6, rtol=1e-6)

    # 3) Ragged batch, Pallas path forced: bulk prefix through the kernel,
    #    37-row remainder through the XLA epilogue + concat.
    x3 = jax.random.normal(k3, (4096 + 37, out_size), dtype=jnp.float32)
    o3 = jax.block_until_ready(platt_diag_forward(x3, W, b, force_pallas=True))
    assert o3.shape == (4096 + 37, out_size)
    assert jnp.allclose(o3, ref_fn(x3), atol=1e-6, rtol=1e-6)

    print("KERNEL_OK")
</pallas_src>

<mosaic_0001>
module attributes {stable_mosaic.version = 11 : i64} {
  func.func @_platt_diag_kernel(%arg0: i32, %arg1: memref<1x8x640xf32, #tpu.memory_space<vmem>>, %arg2: memref<8x640xf32, #tpu.memory_space<vmem>>, %arg3: memref<8x640xf32, #tpu.memory_space<vmem>>, %arg4: memref<1x8x640xf32, #tpu.memory_space<vmem>>) attributes {dimension_semantics = [#tpu.dimension_semantics<parallel>], iteration_bounds = array<i64: 2>, scalar_prefetch = 0 : i64, scratch_operands = 0 : i64, tpu.core_type = #tpu.core_type<tc>, window_params = [{transform_indices = @transform_0, window_bounds = array<i64: 1, 8, 640>}, {pipeline_mode = #tpu.pipeline_mode<synchronous>, transform_indices = @transform_1, window_bounds = array<i64: 8, 640>}, {pipeline_mode = #tpu.pipeline_mode<synchronous>, transform_indices = @transform_2, window_bounds = array<i64: 8, 640>}, {transform_indices = @transform_3, window_bounds = array<i64: 1, 8, 640>}]} {
    %c0 = arith.constant 0 : index
    %c0_0 = arith.constant 0 : index
    %c0_1 = arith.constant 0 : index
    %0 = vector.load %arg1[%c0, %c0_0, %c0_1] : memref<1x8x640xf32, #tpu.memory_space<vmem>>, vector<1x8x640xf32>
    %c0_2 = arith.constant 0 : index
    %c0_3 = arith.constant 0 : index
    %1 = vector.load %arg2[%c0_2, %c0_3] : memref<8x640xf32, #tpu.memory_space<vmem>>, vector<8x640xf32>
    %2 = vector.shape_cast %1 : vector<8x640xf32> to vector<1x8x640xf32>
    %3 = arith.mulf %0, %2 : vector<1x8x640xf32>
    %c0_4 = arith.constant 0 : index
    %c0_5 = arith.constant 0 : index
    %4 = vector.load %arg3[%c0_4, %c0_5] : memref<8x640xf32, #tpu.memory_space<vmem>>, vector<8x640xf32>
    %5 = vector.shape_cast %4 : vector<8x640xf32> to vector<1x8x640xf32>
    %6 = arith.addf %3, %5 : vector<1x8x640xf32>
    %c0_6 = arith.constant 0 : index
    %c0_7 = arith.constant 0 : index
    %c0_8 = arith.constant 0 : index
    %7 = vector.load %arg4[%c0_6, %c0_7, %c0_8] : memref<1x8x640xf32, #tpu.memory_space<vmem>>, vector<1x8x640xf32>
    tpu.vector_store %arg4[%c0_6, %c0_7, %c0_8], %6 {strides = array<i32>} : memref<1x8x640xf32, #tpu.memory_space<vmem>>, vector<1x8x640xf32>,
    return
  }
  func.func @transform_0(%arg0: i32) -> (i32, i32, i32) {
    %c0_i32 = arith.constant 0 : i32
    %c0_i32_0 = arith.constant 0 : i32
    %c0_i32_1 = arith.constant 0 : i32
    return %arg0, %c0_i32, %c0_i32_0 : i32, i32, i32
  }
  func.func @transform_1(%arg0: i32) -> (i32, i32) {
    %c0_i32 = arith.constant 0 : i32
    %c0_i32_0 = arith.constant 0 : i32
    %c0_i32_1 = arith.constant 0 : i32
    return %c0_i32, %c0_i32_0 : i32, i32
  }
  func.func @transform_2(%arg0: i32) -> (i32, i32) {
    %c0_i32 = arith.constant 0 : i32
    %c0_i32_0 = arith.constant 0 : i32
    %c0_i32_1 = arith.constant 0 : i32
    return %c0_i32, %c0_i32_0 : i32, i32
  }
  func.func @transform_3(%arg0: i32) -> (i32, i32, i32) {
    %c0_i32 = arith.constant 0 : i32
    %c0_i32_0 = arith.constant 0 : i32
    %c0_i32_1 = arith.constant 0 : i32
    return %arg0, %c0_i32, %c0_i32_0 : i32, i32, i32
  }
}

</mosaic_0001>

<llo_original>
// kernel: tpu_custom_call.1
$region0: #{tpu_custom_call.1}
  #allocation0 [shape = 'u32[]', space=smem, size = 0x4, offset = 0x4, fixed_abs, tag = 'smem constant byte address 0x4 - core index']
  #allocation1 [shape = 'u32[144,128]{1,0:T(1,128)}', space=vmem, size = 0x12000, scoped, tag = 'internal scratch']
  %s0 = inlined_call_operand.hbm [shape: f32[2,8,640], index: 0, kind: input, shape index: {}]
  %s1 = inlined_call_operand.hbm [shape: f32[8,640], index: 1, kind: input, shape index: {}]
  %s2 = inlined_call_operand.hbm [shape: f32[8,640], index: 2, kind: input, shape index: {}]
  %s3 = inlined_call_operand.hbm [shape: f32[2,8,640], index: 3, kind: output, shape index: {}]
  %s4 = sld [smem:[#allocation0]]
  $region57: #{tpu_custom_call.1} parent=0
    _
  %s6 = ssub.s32 1, %s4
  %s7 = scalar_select 0, %s6, %s4
  $region1: #{tpu_custom_call.1} parent=0
    #allocation2 [shape = 'u8[40960]{0}', space=vmem, size = 0xa000, scoped, tag = 'input window, operand 0']
    #allocation3 [shape = 's32[2]{0}', space=sflag, size = 0x8, scoped, tag = 'scoped memory for tpu_custom_call.1']
    #allocation4 [shape = 's32[2]{0}', space=sflag, size = 0x8, scoped, tag = 'scoped memory for tpu_custom_call.1']
    #allocation5 [shape = 'u8[20480]{0}', space=vmem, size = 0x5000, scoped, tag = 'input window, operand 1, single buffered']
    #allocation6 [shape = 's32[1]{0}', space=sflag, size = 0x4, scoped, tag = 'scoped memory for tpu_custom_call.1']
    #allocation7 [shape = 'u8[20480]{0}', space=vmem, size = 0x5000, scoped, tag = 'input window, operand 2, single buffered']
    #allocation8 [shape = 'u8[40960]{0}', space=vmem, size = 0xa000, scoped, tag = 'output window, operand 0']
    %8 = vsyncpa [#allocation3], 0
    %s9 = scalar_lea.sflag [#allocation3], 1
    %10 = vsyncpa %s9, 0
    %11 = vsyncpa [#allocation6], 0
    %12 = vsyncpa [#allocation4], 0
    %s13 = scalar_lea.sflag [#allocation4], 1
    %14 = vsyncpa %s13, 0
    loop: start=0, step=1, limit=4
    $region2: #{tpu_custom_call.1} parent=1 // loop_pre_header
      _
    $region3: #{tpu_custom_call.1} parent=1 // loop_header
      %s16 = sphi 0, %s20
      %p17 = scmp.ge.s32.totalorder %s16, 4
      %s26 = sphi 0, %s28
      %s29 = sphi 0, %s26
      %s30 = sphi 0, %s29
      %s46 = sphi 0, %s30
      %s50 = sphi 0, %s50
      %s52 = sphi 0, %s50
      %s53 = sphi 0, %s52
      %s67 = sphi 0, %s53
      %s71 = sphi 0, %s71
      %s73 = sphi 0, %s71
      %s74 = sphi 0, %s73
      %s88 = sphi 0, %s74
      %s94 = sphi 0, %s96
      %s97 = sphi 0, %s94
      %s98 = sphi 0, %s97
      %s114 = sphi 0, %s98
    $region4: #{tpu_custom_call.1} parent=1 // loop_header_branch
      %19 = sbr.rel (%p17) target = $region8
    $region5: #{tpu_custom_call.1} parent=1 // loop_body
      %s21 = ssub.s32 %s16, 1
      %s22 = ssub.s32 %s16, 2
      %s23 = sadd.s32 %s16, 1
      %s24 = ssub.s32 %s16, %s23
      %p25 = scmp.eq.s32.totalorder %s24, 0
      %s27 = sadd.s32 %s26, 1
      %s28 = scalar_select %p25, %s26, %s27
      %p31 = pneg %p25
      %p32 = scmp.eq.s32.totalorder %s16, 1
      %p33 = por %p31, %p32
      %p34 = scmp.ne.s32.totalorder %s26, %s29
      %p35 = scmp.eq.s32.totalorder %s16, 0
      %p36 = por %p34, %p35
      %p37 = scmp.ne.s32.totalorder %s26, %s29
      %p38 = scmp.eq.s32.totalorder %s21, 1
      %p39 = por %p37, %p38
      %p40 = scmp.ne.s32.totalorder %s29, %s30
      %p41 = scmp.eq.s32.totalorder %s21, 0
      %p42 = por %p40, %p41
      %p43 = scmp.ne.s32.totalorder %s29, %s30
      %p44 = scmp.eq.s32.totalorder %s22, 1
      %p45 = por %p43, %p44
      %p47 = scmp.ne.s32.totalorder %s30, %s46
      %p48 = scmp.eq.s32.totalorder %s22, 0
      %p49 = por %p47, %p48
      %s51 = sadd.s32 %s50, 1
      %p54 = scmp.eq.s32.totalorder %s16, 1
      %p55 = scmp.ne.s32.totalorder %s50, %s52
      %p56 = scmp.eq.s32.totalorder %s16, 0
      %p57 = por %p55, %p56
      %p58 = scmp.ne.s32.totalorder %s50, %s52
      %p59 = scmp.eq.s32.totalorder %s21, 1
      %p60 = por %p58, %p59
      %p61 = scmp.ne.s32.totalorder %s52, %s53
      %p62 = scmp.eq.s32.totalorder %s21, 0
      %p63 = por %p61, %p62
      %p64 = scmp.ne.s32.totalorder %s52, %s53
      %p65 = scmp.eq.s32.totalorder %s22, 1
      %p66 = por %p64, %p65
      %p68 = scmp.ne.s32.totalorder %s53, %s67
      %p69 = scmp.eq.s32.totalorder %s22, 0
      %p70 = por %p68, %p69
      %s72 = sadd.s32 %s71, 1
      %p75 = scmp.eq.s32.totalorder %s16, 1
      %p76 = scmp.ne.s32.totalorder %s71, %s73
      %p77 = scmp.eq.s32.totalorder %s16, 0
      %p78 = por %p76, %p77
      %p79 = scmp.ne.s32.totalorder %s71, %s73
      %p80 = scmp.eq.s32.totalorder %s21, 1
      %p81 = por %p79, %p80
      %p82 = scmp.ne.s32.totalorder %s73, %s74
      %p83 = scmp.eq.s32.totalorder %s21, 0
      %p84 = por %p82, %p83
      %p85 = scmp.ne.s32.totalorder %s73, %s74
      %p86 = scmp.eq.s32.totalorder %s22, 1
      %p87 = por %p85, %p86
      %p89 = scmp.ne.s32.totalorder %s74, %s88
      %p90 = scmp.eq.s32.totalorder %s22, 0
      %p91 = por %p89, %p90
      %s92 = ssub.s32 %s16, %s23
      %p93 = scmp.eq.s32.totalorder %s92, 0
      %s95 = sadd.s32 %s94, 1
      %s96 = scalar_select %p93, %s94, %s95
      %p99 = pneg %p93
      %p100 = scmp.eq.s32.totalorder %s16, 1
      %p101 = por %p99, %p100
      %p102 = scmp.ne.s32.totalorder %s94, %s97
      %p103 = scmp.eq.s32.totalorder %s16, 0
      %p104 = por %p102, %p103
      %p105 = scmp.ne.s32.totalorder %s94, %s97
      %p106 = scmp.eq.s32.totalorder %s21, 1
      %p107 = por %p105, %p106
      %p108 = scmp.ne.s32.totalorder %s97, %s98
      %p109 = scmp.eq.s32.totalorder %s21, 0
      %p110 = por %p108, %p109
      %p111 = scmp.ne.s32.totalorder %s97, %s98
      %p112 = scmp.eq.s32.totalorder %s22, 1
      %p113 = por %p111, %p112
      %p115 = scmp.ne.s32.totalorder %s98, %s114
      %p116 = scmp.eq.s32.totalorder %s22, 0
      %p117 = por %p115, %p116
      %p118 = scmp.le.s32.totalorder 1, %s16
      %p119 = scmp.lt.s32.totalorder %s16, 3
      %p120 = pnand %p118, %p119
      %p121 = pneg %p120
      // Predicated region
      $region9: #{tpu_custom_call.1} parent=5 // pred_check
        _
      $region10: #{tpu_custom_call.1} parent=5 // pred_check_branch
        %123 = sbr.rel (%p120) target = $region12
      $region11: #{tpu_custom_call.1} parent=5 // pred_region
        %s124 = ssub.s32 %s16, 1
        // Predicated region
        $region13: #{tpu_custom_call.1} parent=11 // pred_check
          %p125 = pneg %p63
        $region14: #{tpu_custom_call.1} parent=11 // pred_check_branch
          %127 = sbr.rel (%p125) target = $region16
        $region15: #{tpu_custom_call.1} parent=11 // pred_region
          %s129 = ssub.s32 640, 640
          %130 = vsyncadd [#allocation6], %s129
          %s132 = sshll.u32 [#allocation5], 4
          %s133 = int_to_ptr.vmem [resolvable:$true] %s132
          %135 = dma.hbm_to_vmem [thread:$0]  %s1, 640, %s133, [#allocation6]
        $region16: #{tpu_custom_call.1} parent=11 // pred_fallthru
          _
        // Predicated region
        $region17: #{tpu_custom_call.1} parent=11 // pred_check
          %p136 = pneg %p84
        $region18: #{tpu_custom_call.1} parent=11 // pred_check_branch
          %138 = sbr.rel (%p136) target = $region20
        $region19: #{tpu_custom_call.1} parent=11 // pred_region
          %s140 = ssub.s32 640, 640
          %141 = vsyncadd [#allocation6], %s140
          %s143 = sshll.u32 [#allocation7], 4
          %s144 = int_to_ptr.vmem [resolvable:$true] %s143
          %146 = dma.hbm_to_vmem [thread:$0]  %s2, 640, %s144, [#allocation6]
        $region20: #{tpu_custom_call.1} parent=11 // pred_fallthru
          _
      $region12: #{tpu_custom_call.1} parent=5 // pred_fallthru
        _
      %p147 = scmp.lt.s32.totalorder %s16, 2
      // Predicated region
      $region21: #{tpu_custom_call.1} parent=5 // pred_check
        %p148 = pneg %p147
      $region22: #{tpu_custom_call.1} parent=5 // pred_check_branch
        %150 = sbr.rel (%p148) target = $region24
      $region23: #{tpu_custom_call.1} parent=5 // pred_region
        // Predicated region
        $region25: #{tpu_custom_call.1} parent=23 // pred_check
          %p151 = pneg %p36
        $region26: #{tpu_custom_call.1} parent=23 // pred_check_branch
          %153 = sbr.rel (%p151) target = $region28
        $region27: #{tpu_custom_call.1} parent=23 // pred_region
          %s154 = sand.u32 %s26, 1
          %s155 = scalar_lea.sflag [#allocation3], %s154
          %s156 = sand.u32 %s26, 1
          %s157 = smul.addr %s156, 40
          %s158 = scalar_lea.vmem [#allocation2], %s157
          %s160 = ssub.s32 640, 640
          %161 = vsyncadd %s155, %s160
          %s162 = smul.addr %s16, 5
          %s163 = smul.addr %s162, 128
          %s164 = scalar_lea.hbm %s0, %s163
          %s166 = sshll.u32 %s158, 4
          %s167 = int_to_ptr.vmem [resolvable:$true] %s166
          %169 = dma.hbm_to_vmem [thread:$0]  %s164, 640, %s167, %s155
        $region28: #{tpu_custom_call.1} parent=23 // pred_fallthru
          _
      $region24: #{tpu_custom_call.1} parent=5 // pred_fallthru
        _
      %p170 = scmp.le.s32.totalorder 1, %s16
      %p171 = scmp.lt.s32.totalorder %s16, 3
      %p172 = pnand %p170, %p171
      %p173 = pneg %p172
      // Predicated region
      $region29: #{tpu_custom_call.1} parent=5 // pred_check
        _
      $region30: #{tpu_custom_call.1} parent=5 // pred_check_branch
        %175 = sbr.rel (%p172) target = $region32
      $region31: #{tpu_custom_call.1} parent=5 // pred_region
        %s176 = ssub.s32 %s16, 1
        %s177 = sand.u32 %s29, 1
        %s178 = scalar_lea.sflag [#allocation3], %s177
        %s179 = sand.u32 %s29, 1
        %s180 = smul.addr %s179, 40
        %s181 = scalar_lea.vmem [#allocation2], %s180
        // Predicated region
        $region33: #{tpu_custom_call.1} parent=31 // pred_check
          %p182 = pneg %p42
        $region34: #{tpu_custom_call.1} parent=31 // pred_check_branch
          %184 = sbr.rel (%p182) target = $region36
        $region35: #{tpu_custom_call.1} parent=31 // pred_region
          %185 = dma.done %s178, 640
        $region36: #{tpu_custom_call.1} parent=31 // pred_fallthru
          _
        // Predicated region
        $region37: #{tpu_custom_call.1} parent=31 // pred_check
          %p186 = pneg %p63
        $region38: #{tpu_custom_call.1} parent=31 // pred_check_branch
          %188 = sbr.rel (%p186) target = $region40
        $region39: #{tpu_custom_call.1} parent=31 // pred_region
          %189 = dma.done [#allocation6], 640
        $region40: #{tpu_custom_call.1} parent=31 // pred_fallthru
          _
        // Predicated region
        $region41: #{tpu_custom_call.1} parent=31 // pred_check
          %p190 = pneg %p84
        $region42: #{tpu_custom_call.1} parent=31 // pred_check_branch
          %192 = sbr.rel (%p190) target = $region44
        $region43: #{tpu_custom_call.1} parent=31 // pred_region
          %193 = dma.done [#allocation6], 640
        $region44: #{tpu_custom_call.1} parent=31 // pred_fallthru
          _
        %s194 = sand.u32 %s29, 1
        %s195 = scalar_lea.sflag [#allocation3], %s194
        %s196 = sand.u32 %s29, 1
        %s197 = smul.addr %s196, 40
        %s198 = scalar_lea.vmem [#allocation2], %s197
        %p199 = pneg %p42
        %p200 = pneg %p39
        %p201 = pneg %p63
        %p202 = pneg %p60
        %p203 = pneg %p84
        %p204 = pneg %p81
        %p205 = pneg %p110
        %p206 = pneg %p107
        %s207 = sand.u32 %s97, 1
        %s208 = scalar_lea.sflag [#allocation4], %s207
        %s209 = sand.u32 %s97, 1
        %s210 = smul.addr %s209, 40
        %s211 = scalar_lea.vmem [#allocation8], %s210
        %v212 = vld [vmem:[%s181] sm:$0xff]
        %v213 = vld [vmem:[%s181 + $0x8] sm:$0xff]
        %v214 = vld [vmem:[%s181 + $0x10] sm:$0xff]
        %v215 = vld [vmem:[%s181 + $0x18] sm:$0xff]
        %v216 = vld [vmem:[%s181 + $0x20] sm:$0xff]
        %v217 = vld [vmem:[#allocation5] sm:$0xff]
        %v218 = vld [vmem:[#allocation5 + $0x8] sm:$0xff]
        %v219 = vld [vmem:[#allocation5 + $0x10] sm:$0xff]
        %v220 = vld [vmem:[#allocation5 + $0x18] sm:$0xff]
        %v221 = vld [vmem:[#allocation5 + $0x20] sm:$0xff]
        %v222 = vmul.f32 %v212, %v217
        %v223 = vmul.f32 %v213, %v218
        %v224 = vmul.f32 %v214, %v219
        %v225 = vmul.f32 %v215, %v220
        %v226 = vmul.f32 %v216, %v221
        %v227 = vld [vmem:[#allocation7] sm:$0xff]
        %v228 = vld [vmem:[#allocation7 + $0x8] sm:$0xff]
        %v229 = vld [vmem:[#allocation7 + $0x10] sm:$0xff]
        %v230 = vld [vmem:[#allocation7 + $0x18] sm:$0xff]
        %v231 = vld [vmem:[#allocation7 + $0x20] sm:$0xff]
        %v232 = vadd.f32 %v222, %v227
        %v233 = vadd.f32 %v223, %v228
        %v234 = vadd.f32 %v224, %v229
        %v235 = vadd.f32 %v225, %v230
        %v236 = vadd.f32 %v226, %v231
        %237 = vst [vmem:[%s211] sm:$0xff] %v232
        %238 = vst [vmem:[%s211 + $0x8] sm:$0xff] %v233
        %239 = vst [vmem:[%s211 + $0x10] sm:$0xff] %v234
        %240 = vst [vmem:[%s211 + $0x18] sm:$0xff] %v235
        %241 = vst [vmem:[%s211 + $0x20] sm:$0xff] %v236
        %s242 = sand.u32 %s97, 1
        %s243 = scalar_lea.sflag [#allocation4], %s242
        %s244 = sand.u32 %s97, 1
        %s245 = smul.addr %s244, 40
        %s246 = scalar_lea.vmem [#allocation8], %s245
        // Predicated region
        $region45: #{tpu_custom_call.1} parent=31 // pred_check
          %p247 = pneg %p107
        $region46: #{tpu_custom_call.1} parent=31 // pred_check_branch
          %249 = sbr.rel (%p247) target = $region48
        $region47: #{tpu_custom_call.1} parent=31 // pred_region
          %s251 = ssub.s32 640, 640
          %252 = vsyncadd %s243, %s251
          %s253 = smul.addr %s21, 5
          %s254 = smul.addr %s253, 128
          %s255 = scalar_lea.hbm %s3, %s254
          %s257 = sshll.u32 %s246, 4
          %s258 = int_to_ptr.vmem [resolvable:$true] %s257
          %260 = dma.vmem_to_hbm [thread:$0]  %s258, 640, %s255, %s243
        $region48: #{tpu_custom_call.1} parent=31 // pred_fallthru
          _
      $region32: #{tpu_custom_call.1} parent=5 // pred_fallthru
        _
      %p261 = scmp.le.s32.totalorder 2, %s16
      // Predicated region
      $region49: #{tpu_custom_call.1} parent=5 // pred_check
        %p262 = pneg %p261
      $region50: #{tpu_custom_call.1} parent=5 // pred_check_branch
        %264 = sbr.rel (%p262) target = $region52
      $region51: #{tpu_custom_call.1} parent=5 // pred_region
        %s265 = ssub.s32 %s16, 2
        // Predicated region
        $region53: #{tpu_custom_call.1} parent=51 // pred_check
          %p266 = pneg %p113
        $region54: #{tpu_custom_call.1} parent=51 // pred_check_branch
          %268 = sbr.rel (%p266) target = $region56
        $region55: #{tpu_custom_call.1} parent=51 // pred_region
          %s269 = sand.u32 %s98, 1
          %s270 = scalar_lea.sflag [#allocation4], %s269
          %s271 = sand.u32 %s98, 1
          %s272 = smul.addr %s271, 40
          %s273 = scalar_lea.vmem [#allocation8], %s272
          %274 = dma.done %s270, 640
        $region56: #{tpu_custom_call.1} parent=51 // pred_fallthru
          _
      $region52: #{tpu_custom_call.1} parent=5 // pred_fallthru
        _
    $region6: #{tpu_custom_call.1} parent=1 // loop_footer
      %s20 = sadd.s32 1, %s16
    $region7: #{tpu_custom_call.1} parent=1 // loop_footer_branch
      %15 = sbr.rel target = $region3
    $region8: #{tpu_custom_call.1} parent=1 // loop_exit
      _
    %275 = vsyncpa [#allocation3], 1
    %s276 = scalar_lea.sflag [#allocation3], 1
    %277 = vsyncpa %s276, 1
    %278 = vsyncpa [#allocation6], 1
    %279 = vsyncpa [#allocation4], 1
    %s280 = scalar_lea.sflag [#allocation4], 1
    %281 = vsyncpa %s280, 1

</llo_original>
